<compile_context>
chip_gen: v5e
topology: v5e:2x2
jax: 0.10.0
libtpu: 0.0.40
codegen_flags: <defaults>
</compile_context>

<pallas_src>
import functools

import jax
import jax.numpy as jnp
from jax.experimental import pallas as pl
from jax.experimental.pallas import tpu as pltpu

# The reference PyTorch module reads a module-global `eps` that is not defined in the
# snippet; we use the conventional value 1e-6.
# TODO(synk): confirm the real `eps` value used by the original codebase before shipping.
EPS = 1e-6

_LANE = 128   # vreg lane width (last dim)
_SUBLANE = 8  # f32 sublane count (second-to-last dim)


def _round_up(n, m):
    return ((n + m - 1) // m) * m


def _pad2(a, rows, cols):
    r, c = a.shape
    if r == rows and c == cols:
        return a
    return jnp.pad(a, ((0, rows - r), (0, cols - c)))


def _vmem_capacity_bytes():
    try:
        return int(pltpu.get_tpu_info().vmem_capacity_bytes)
    except Exception:
        return 128 * 1024 * 1024  # conservative v5e/v6e default


def prepare_params(params, *, use_bf16=True):
    """One-time weight preparation, hoisted out of the inference path.

    * zero-pads every feature dim to a 128-lane multiple,
    * fuses [lin_mu | lin_sigma] into a single (H_pad, 2*H_pad) weight/bias,
    * folds the mu-head `/10` into the mu columns of the fused weight/bias,
    * casts weight matrices (not biases) to bf16 when use_bf16.

    Call this ONCE and reuse the returned dict across first_inference() calls.
    """
    input_dim, hidden_dim = params["w_in"].shape
    d_in_p = _round_up(input_dim, _LANE)
    h_p = _round_up(hidden_dim, _LANE)
    w_dtype = jnp.bfloat16 if use_bf16 else jnp.float32

    w_in = _pad2(params["w_in"], d_in_p, h_p).astype(w_dtype)
    w1 = _pad2(params["w1"], h_p, h_p).astype(w_dtype)
    w2 = _pad2(params["w2"], h_p, h_p).astype(w_dtype)
    # mu = 10*tanh((h@w_mu + b_mu)/10) == 10*tanh(h@(w_mu/10) + b_mu/10): fold /10 here.
    w_ms = jnp.concatenate(
        [_pad2(params["w_mu"] / 10.0, h_p, h_p), _pad2(params["w_sig"], h_p, h_p)],
        axis=1,
    ).astype(w_dtype)
    b_in = _pad2(params["b_in"], 1, h_p).astype(jnp.float32)
    b1 = _pad2(params["b1"], 1, h_p).astype(jnp.float32)
    b2 = _pad2(params["b2"], 1, h_p).astype(jnp.float32)
    b_ms = jnp.concatenate(
        [_pad2(params["b_mu"] / 10.0, 1, h_p), _pad2(params["b_sig"], 1, h_p)], axis=1
    ).astype(jnp.float32)

    return dict(
        w_in=w_in, b_in=b_in, w1=w1, b1=b1, w2=w2, b2=b2, w_ms=w_ms, b_ms=b_ms,
        input_dim=int(input_dim), hidden_dim=int(hidden_dim),
        d_in_p=int(d_in_p), h_p=int(h_p), use_bf16=bool(use_bf16),
    )


def _first_inference_kernel(
    x_ref,
    w_in_ref, b_in_ref,
    w1_ref, b1_ref,
    w2_ref, b2_ref,
    w_ms_ref, b_ms_ref,          # fused [lin_mu/10 | lin_sigma] weight / bias
    mu_ref, sigma_ref,
    *, h_pad,
):
    cdt = w_in_ref.dtype  # MXU input dtype (f32 or bf16); accumulation is always f32.

    # new_hidden = tanh(input_lin(x))
    h = jnp.tanh(
        jnp.dot(x_ref[...], w_in_ref[...], preferred_element_type=jnp.float32)
        + b_in_ref[...]
    )
    # two hidden layers, each followed by tanh
    h = jnp.tanh(
        jnp.dot(h.astype(cdt), w1_ref[...], preferred_element_type=jnp.float32)
        + b1_ref[...]
    )
    h = jnp.tanh(
        jnp.dot(h.astype(cdt), w2_ref[...], preferred_element_type=jnp.float32)
        + b2_ref[...]
    )

    # Fused mu/sigma projection: one lane-dense (tb, 2*h_pad) matmul.
    ms = (
        jnp.dot(h.astype(cdt), w_ms_ref[...], preferred_element_type=jnp.float32)
        + b_ms_ref[...]
    )
    # /10 was folded into w_ms/b_ms at prepare_params() time; only the outer *10 remains.
    mu_ref[...] = (10.0 * jnp.tanh(ms[:, :h_pad])).astype(mu_ref.dtype)
    sigma_ref[...] = (jax.nn.sigmoid(ms[:, h_pad:]) + EPS).astype(sigma_ref.dtype)


def first_inference(x, params, *, batch_tile=None, use_bf16=True,
                    out_dtype=jnp.float32):
    """FirstInference forward pass via a single Pallas TPU kernel.

    Args:
      x: (batch, input_dim) float32.
      params: output of prepare_params() (preferred, weights prepared once), or the
        raw dict from init_params() (prepared on the fly).
      batch_tile: rows per grid step; default derived from VMEM budget / batch.
      use_bf16: bf16 weights/activations with f32 accumulation (ignored if params
        already prepared).
      out_dtype: dtype of the mu/sigma outputs (bf16 halves writeback bytes on v5e).
    Returns:
      (mu, sigma), each (batch, hidden_dim) of out_dtype.
    """
    if "w_ms" not in params:           # raw params: prepare (per-call cost — avoid).
        params = prepare_params(params, use_bf16=use_bf16)
    prep = params
    use_bf16 = prep["use_bf16"]

    batch, input_dim = x.shape
    assert input_dim == prep["input_dim"]
    d_in_p, h_p, hidden_dim = prep["d_in_p"], prep["h_p"], prep["hidden_dim"]

    w_dtype = jnp.bfloat16 if use_bf16 else jnp.float32
    wb = 2 if use_bf16 else 4
    out_bytes = jnp.dtype(out_dtype).itemsize

    # ---- generation-aware VMEM budget ----
    vmem_limit = int(_vmem_capacity_bytes() * 0.85)

    n_weight = prep["w_in"].size + prep["w1"].size + prep["w2"].size + prep["w_ms"].size
    n_bias = prep["b_in"].size + prep["b1"].size + prep["b2"].size + prep["b_ms"].size
    weight_bytes = n_weight * wb + n_bias * 4            # single-buffered (index-constant)

    # Per-batch-row VMEM: double-buffered x tile + double-buffered mu/sigma tiles
    # + ~4 f32 rows of h/ms temporaries.
    per_row = d_in_p * wb * 2 + 2 * h_p * out_bytes * 2 + 4 * h_p * 4

    # ---- batch tile: big enough to amortize ~0.35us/step, >=2 steps for v7x megacore,
    #      minimal tail padding, and sized to fit the VMEM budget ----
    mult = 16 if use_bf16 else _SUBLANE                  # keep bf16 x/h sublane-packed
    if batch_tile is None:
        desired = 1024
        nsteps = max(1, pl.cdiv(batch, desired))
        if batch >= 2 * mult:
            nsteps = max(nsteps, 2)                      # let v7x's 2 TCs both work
        tb = _round_up(pl.cdiv(batch, nsteps), mult)
    else:
        assert batch_tile % mult == 0, f"batch_tile must be a multiple of {mult}"
        tb = batch_tile
    max_tb = int((0.8 * vmem_limit - weight_bytes) // per_row)
    max_tb = max(mult, (max_tb // mult) * mult)
    tb = max(mult, min(tb, max_tb))
    # TODO(synk): for very large hidden_dim (weights no longer VMEM-resident, esp. on
    # v7x's 64 MiB), add a second grid axis tiling the fused w_ms output columns.

    batch_p = _round_up(batch, tb)
    grid = (batch_p // tb,)

    # Per-call input prep is just the x pad/cast; all weight prep lives in prepare_params.
    xp = _pad2(x.astype(jnp.float32), batch_p, d_in_p).astype(w_dtype)

    cost = pl.CostEstimate(
        flops=2 * batch_p * (d_in_p * h_p + 4 * h_p * h_p),
        transcendentals=5 * batch_p * h_p,
        bytes_accessed=int(xp.size * wb + weight_bytes + 2 * batch_p * h_p * out_bytes),
    )

    def run(single_buffer_weights):
        wkw = dict(pipeline_mode=pl.Buffered(1)) if single_buffer_weights else {}

        def rep(shape):  # index-constant (replicated) weight/bias spec
            return pl.BlockSpec(shape, lambda i: (0, 0), **wkw)

        in_specs = [
            pl.BlockSpec((tb, d_in_p), lambda i: (i, 0)),   # x: tiled over batch
            rep((d_in_p, h_p)), rep((1, h_p)),              # input_lin
            rep((h_p, h_p)), rep((1, h_p)),                 # layers[0]
            rep((h_p, h_p)), rep((1, h_p)),                 # layers[1]
            rep((h_p, 2 * h_p)), rep((1, 2 * h_p)),         # fused [lin_mu | lin_sigma]
        ]
        out_specs = (
            pl.BlockSpec((tb, h_p), lambda i: (i, 0)),      # mu   (lane-dense)
            pl.BlockSpec((tb, h_p), lambda i: (i, 0)),      # sigma
        )
        out_shape = (
            jax.ShapeDtypeStruct((batch_p, h_p), out_dtype),
            jax.ShapeDtypeStruct((batch_p, h_p), out_dtype),
        )
        return pl.pallas_call(
            functools.partial(_first_inference_kernel, h_pad=h_p),
            out_shape=out_shape,
            grid_spec=pl.GridSpec(grid=grid, in_specs=in_specs, out_specs=out_specs),
            compiler_params=pltpu.CompilerParams(
                dimension_semantics=("parallel",),
                vmem_limit_bytes=vmem_limit,
            ),
            cost_estimate=cost,
        )(xp, prep["w_in"], prep["b_in"], prep["w1"], prep["b1"],
          prep["w2"], prep["b2"], prep["w_ms"], prep["b_ms"])

    try:
        mu_p, sigma_p = run(single_buffer_weights=True)
    except Exception:
        # TODO(synk): drop this fallback once pipeline_mode=pl.Buffered(1) on
        # index-constant specs is reliably supported by the main grid pipeline.
        mu_p, sigma_p = run(single_buffer_weights=False)

    return mu_p[:batch, :hidden_dim], sigma_p[:batch, :hidden_dim]


def init_params(key, input_dim, hidden_dim):
    """Deterministic init mimicking nn.Linear's uniform(-1/sqrt(fan_in), 1/sqrt(fan_in)).

    Weights are stored as (in_features, out_features) for y = x @ W + b.
    Biases are stored as (1, out_features).
    """
    def linear(k, fan_in, fan_out):
        kw, kb = jax.random.split(k)
        bound = 1.0 / (fan_in ** 0.5)
        w = jax.random.uniform(kw, (fan_in, fan_out), jnp.float32, -bound, bound)
        b = jax.random.uniform(kb, (1, fan_out), jnp.float32, -bound, bound)
        return w, b

    keys = jax.random.split(key, 5)
    w_in, b_in = linear(keys[0], input_dim, hidden_dim)
    w1, b1 = linear(keys[1], hidden_dim, hidden_dim)
    w2, b2 = linear(keys[2], hidden_dim, hidden_dim)
    w_mu, b_mu = linear(keys[3], hidden_dim, hidden_dim)
    w_sig, b_sig = linear(keys[4], hidden_dim, hidden_dim)
    return dict(
        w_in=w_in, b_in=b_in,
        w1=w1, b1=b1,
        w2=w2, b2=b2,
        w_mu=w_mu, b_mu=b_mu,
        w_sig=w_sig, b_sig=b_sig,
    )


def first_inference_ref(x, p):
    """Pure-JAX reference for correctness checking."""
    h = jnp.tanh(x @ p["w_in"] + p["b_in"])
    h = jnp.tanh(h @ p["w1"] + p["b1"])
    h = jnp.tanh(h @ p["w2"] + p["b2"])
    mu = 10.0 * jnp.tanh((h @ p["w_mu"] + p["b_mu"]) / 10.0)
    sigma = jax.nn.sigmoid(h @ p["w_sig"] + p["b_sig"]) + EPS
    return mu, sigma


if __name__ == "__main__":
    key = jax.random.PRNGKey(0)
    k_x, k_p, k_x2 = jax.random.split(key, 3)

    batch, input_dim, hidden_dim = 8, 16, 32
    x = jax.random.normal(k_x, (batch, input_dim), jnp.float32)
    params = init_params(k_p, input_dim, hidden_dim)

    mu_ref, sigma_ref = first_inference_ref(x, params)

    # f32 path (exact match with reference).
    prep_f32 = prepare_params(params, use_bf16=False)
    mu, sigma = first_inference(x, prep_f32)
    mu, sigma = jax.block_until_ready((mu, sigma))
    assert mu.shape == (batch, hidden_dim) and sigma.shape == (batch, hidden_dim)
    assert jnp.allclose(mu, mu_ref, atol=1e-5, rtol=1e-5)
    assert jnp.allclose(sigma, sigma_ref, atol=1e-5, rtol=1e-5)

    # Default fast path: bf16 weights/activations, f32 accumulation. Weights prepared
    # ONCE here and reused across subsequent calls (per perf review).
    prep = prepare_params(params)
    mu_b, sigma_b = first_inference(x, prep)
    mu_b, sigma_b = jax.block_until_ready((mu_b, sigma_b))
    assert bool(jnp.all(jnp.isfinite(mu_b))) and bool(jnp.all(jnp.isfinite(sigma_b)))
    assert jnp.allclose(mu_b, mu_ref, atol=0.25)
    assert jnp.allclose(sigma_b, sigma_ref, atol=0.05)

    # Multi-step grid: exercises tail padding and >=2 "parallel" steps (v7x megacore).
    batch2 = 40
    x2 = jax.random.normal(k_x2, (batch2, input_dim), jnp.float32)
    mu2_ref, sigma2_ref = first_inference_ref(x2, params)
    mu2, sigma2 = first_inference(x2, prep)
    mu2, sigma2 = jax.block_until_ready((mu2, sigma2))
    assert mu2.shape == (batch2, hidden_dim) and sigma2.shape == (batch2, hidden_dim)
    assert jnp.allclose(mu2, mu2_ref, atol=0.25)
    assert jnp.allclose(sigma2, sigma2_ref, atol=0.05)

    print("KERNEL_OK")
</pallas_src>

<mosaic_0001>
module attributes {stable_mosaic.version = 11 : i64} {
  func.func @_first_inference_kernel(%arg0: i32, %arg1: memref<8x128xf32, #tpu.memory_space<vmem>>, %arg2: memref<128x128xf32, #tpu.memory_space<vmem>>, %arg3: memref<1x128xf32, #tpu.memory_space<vmem>>, %arg4: memref<128x128xf32, #tpu.memory_space<vmem>>, %arg5: memref<1x128xf32, #tpu.memory_space<vmem>>, %arg6: memref<128x128xf32, #tpu.memory_space<vmem>>, %arg7: memref<1x128xf32, #tpu.memory_space<vmem>>, %arg8: memref<128x256xf32, #tpu.memory_space<vmem>>, %arg9: memref<1x256xf32, #tpu.memory_space<vmem>>, %arg10: memref<8x128xf32, #tpu.memory_space<vmem>>, %arg11: memref<8x128xf32, #tpu.memory_space<vmem>>) attributes {dimension_semantics = [#tpu.dimension_semantics<parallel>], iteration_bounds = array<i64: 1>, scalar_prefetch = 0 : i64, scratch_operands = 0 : i64, tpu.core_type = #tpu.core_type<tc>, window_params = [{transform_indices = @transform_0, window_bounds = array<i64: 8, 128>}, {pipeline_mode = #tpu.pipeline_mode<synchronous>, transform_indices = @transform_1, window_bounds = array<i64: 128, 128>}, {pipeline_mode = #tpu.pipeline_mode<synchronous>, transform_indices = @transform_2, window_bounds = array<i64: 1, 128>}, {pipeline_mode = #tpu.pipeline_mode<synchronous>, transform_indices = @transform_3, window_bounds = array<i64: 128, 128>}, {pipeline_mode = #tpu.pipeline_mode<synchronous>, transform_indices = @transform_4, window_bounds = array<i64: 1, 128>}, {pipeline_mode = #tpu.pipeline_mode<synchronous>, transform_indices = @transform_5, window_bounds = array<i64: 128, 128>}, {pipeline_mode = #tpu.pipeline_mode<synchronous>, transform_indices = @transform_6, window_bounds = array<i64: 1, 128>}, {pipeline_mode = #tpu.pipeline_mode<synchronous>, transform_indices = @transform_7, window_bounds = array<i64: 128, 256>}, {pipeline_mode = #tpu.pipeline_mode<synchronous>, transform_indices = @transform_8, window_bounds = array<i64: 1, 256>}, {transform_indices = @transform_9, window_bounds = array<i64: 8, 128>}, {transform_indices = @transform_10, window_bounds = array<i64: 8, 128>}]} {
    %c0 = arith.constant 0 : index
    %c0_0 = arith.constant 0 : index
    %0 = vector.load %arg1[%c0, %c0_0] : memref<8x128xf32, #tpu.memory_space<vmem>>, vector<8x128xf32>
    %c0_1 = arith.constant 0 : index
    %c0_2 = arith.constant 0 : index
    %1 = vector.load %arg2[%c0_1, %c0_2] : memref<128x128xf32, #tpu.memory_space<vmem>>, vector<128x128xf32>
    %cst = arith.constant dense<0.000000e+00> : vector<8x128xf32>
    %2 = tpu.matmul %0, %1, %cst {dimension_numbers = #tpu.dot_dimension_numbers<[1], [0], [0], [1], [0, 0, 1, 1], [], []>} : vector<8x128xf32>, vector<128x128xf32>, vector<8x128xf32> -> vector<8x128xf32>
    %c0_3 = arith.constant 0 : index
    %c0_4 = arith.constant 0 : index
    %3 = vector.load %arg3[%c0_3, %c0_4] : memref<1x128xf32, #tpu.memory_space<vmem>>, vector<1x128xf32>
    %4 = vector.broadcast %3 : vector<1x128xf32> to vector<8x128xf32>
    %5 = arith.addf %2, %4 : vector<8x128xf32>
    %6 = math.tanh %5 : vector<8x128xf32>
    %c0_5 = arith.constant 0 : index
    %c0_6 = arith.constant 0 : index
    %7 = vector.load %arg4[%c0_5, %c0_6] : memref<128x128xf32, #tpu.memory_space<vmem>>, vector<128x128xf32>
    %cst_7 = arith.constant dense<0.000000e+00> : vector<8x128xf32>
    %8 = tpu.matmul %6, %7, %cst_7 {dimension_numbers = #tpu.dot_dimension_numbers<[1], [0], [0], [1], [0, 0, 1, 1], [], []>} : vector<8x128xf32>, vector<128x128xf32>, vector<8x128xf32> -> vector<8x128xf32>
    %c0_8 = arith.constant 0 : index
    %c0_9 = arith.constant 0 : index
    %9 = vector.load %arg5[%c0_8, %c0_9] : memref<1x128xf32, #tpu.memory_space<vmem>>, vector<1x128xf32>
    %10 = vector.broadcast %9 : vector<1x128xf32> to vector<8x128xf32>
    %11 = arith.addf %8, %10 : vector<8x128xf32>
    %12 = math.tanh %11 : vector<8x128xf32>
    %c0_10 = arith.constant 0 : index
    %c0_11 = arith.constant 0 : index
    %13 = vector.load %arg6[%c0_10, %c0_11] : memref<128x128xf32, #tpu.memory_space<vmem>>, vector<128x128xf32>
    %cst_12 = arith.constant dense<0.000000e+00> : vector<8x128xf32>
    %14 = tpu.matmul %12, %13, %cst_12 {dimension_numbers = #tpu.dot_dimension_numbers<[1], [0], [0], [1], [0, 0, 1, 1], [], []>} : vector<8x128xf32>, vector<128x128xf32>, vector<8x128xf32> -> vector<8x128xf32>
    %c0_13 = arith.constant 0 : index
    %c0_14 = arith.constant 0 : index
    %15 = vector.load %arg7[%c0_13, %c0_14] : memref<1x128xf32, #tpu.memory_space<vmem>>, vector<1x128xf32>
    %16 = vector.broadcast %15 : vector<1x128xf32> to vector<8x128xf32>
    %17 = arith.addf %14, %16 : vector<8x128xf32>
    %18 = math.tanh %17 : vector<8x128xf32>
    %c0_15 = arith.constant 0 : index
    %c0_16 = arith.constant 0 : index
    %19 = vector.load %arg8[%c0_15, %c0_16] : memref<128x256xf32, #tpu.memory_space<vmem>>, vector<128x256xf32>
    %cst_17 = arith.constant dense<0.000000e+00> : vector<8x256xf32>
    %20 = tpu.matmul %18, %19, %cst_17 {dimension_numbers = #tpu.dot_dimension_numbers<[1], [0], [0], [1], [0, 0, 1, 1], [], []>} : vector<8x128xf32>, vector<128x256xf32>, vector<8x256xf32> -> vector<8x256xf32>
    %c0_18 = arith.constant 0 : index
    %c0_19 = arith.constant 0 : index
    %21 = vector.load %arg9[%c0_18, %c0_19] : memref<1x256xf32, #tpu.memory_space<vmem>>, vector<1x256xf32>
    %22 = vector.broadcast %21 : vector<1x256xf32> to vector<8x256xf32>
    %23 = arith.addf %20, %22 : vector<8x256xf32>
    %24 = vector.extract_strided_slice %23 {offsets = [0, 0], sizes = [8, 128], strides = [1, 1]} : vector<8x256xf32> to vector<8x128xf32>
    %25 = math.tanh %24 : vector<8x128xf32>
    %cst_20 = arith.constant 1.000000e+01 : f32
    %26 = vector.broadcast %cst_20 : f32 to vector<8x128xf32>
    %27 = arith.mulf %26, %25 : vector<8x128xf32>
    %c0_21 = arith.constant 0 : index
    %c0_22 = arith.constant 0 : index
    %28 = vector.load %arg10[%c0_21, %c0_22] : memref<8x128xf32, #tpu.memory_space<vmem>>, vector<8x128xf32>
    tpu.vector_store %arg10[%c0_21, %c0_22], %27 {strides = array<i32>} : memref<8x128xf32, #tpu.memory_space<vmem>>, vector<8x128xf32>,
    %29 = vector.extract_strided_slice %23 {offsets = [0, 128], sizes = [8, 128], strides = [1, 1]} : vector<8x256xf32> to vector<8x128xf32>
    %30 = arith.negf %29 : vector<8x128xf32>
    %31 = math.exp %30 : vector<8x128xf32>
    %cst_23 = arith.constant 1.000000e+00 : f32
    %32 = vector.broadcast %cst_23 : f32 to vector<8x128xf32>
    %33 = arith.addf %32, %31 : vector<8x128xf32>
    %34 = arith.divf %32, %33 : vector<8x128xf32>
    %cst_24 = arith.constant 9.99999997E-7 : f32
    %35 = vector.broadcast %cst_24 : f32 to vector<8x128xf32>
    %36 = arith.addf %34, %35 : vector<8x128xf32>
    %c0_25 = arith.constant 0 : index
    %c0_26 = arith.constant 0 : index
    %37 = vector.load %arg11[%c0_25, %c0_26] : memref<8x128xf32, #tpu.memory_space<vmem>>, vector<8x128xf32>
    tpu.vector_store %arg11[%c0_25, %c0_26], %36 {strides = array<i32>} : memref<8x128xf32, #tpu.memory_space<vmem>>, vector<8x128xf32>,
    return
  }
  func.func @transform_0(%arg0: i32) -> (i32, i32) {
    %c0_i32 = arith.constant 0 : i32
    %c0_i32_0 = arith.constant 0 : i32
    return %arg0, %c0_i32 : i32, i32
  }
  func.func @transform_1(%arg0: i32) -> (i32, i32) {
    %c0_i32 = arith.constant 0 : i32
    %c0_i32_0 = arith.constant 0 : i32
    %c0_i32_1 = arith.constant 0 : i32
    return %c0_i32, %c0_i32_0 : i32, i32
  }
  func.func @transform_2(%arg0: i32) -> (i32, i32) {
    %c0_i32 = arith.constant 0 : i32
    %c0_i32_0 = arith.constant 0 : i32
    %c0_i32_1 = arith.constant 0 : i32
    return %c0_i32, %c0_i32_0 : i32, i32
  }
  func.func @transform_3(%arg0: i32) -> (i32, i32) {
    %c0_i32 = arith.constant 0 : i32
    %c0_i32_0 = arith.constant 0 : i32
    %c0_i32_1 = arith.constant 0 : i32
    return %c0_i32, %c0_i32_0 : i32, i32
  }
  func.func @transform_4(%arg0: i32) -> (i32, i32) {
    %c0_i32 = arith.constant 0 : i32
    %c0_i32_0 = arith.constant 0 : i32
    %c0_i32_1 = arith.constant 0 : i32
    return %c0_i32, %c0_i32_0 : i32, i32
  }
  func.func @transform_5(%arg0: i32) -> (i32, i32) {
    %c0_i32 = arith.constant 0 : i32
    %c0_i32_0 = arith.constant 0 : i32
    %c0_i32_1 = arith.constant 0 : i32
    return %c0_i32, %c0_i32_0 : i32, i32
  }
  func.func @transform_6(%arg0: i32) -> (i32, i32) {
    %c0_i32 = arith.constant 0 : i32
    %c0_i32_0 = arith.constant 0 : i32
    %c0_i32_1 = arith.constant 0 : i32
    return %c0_i32, %c0_i32_0 : i32, i32
  }
  func.func @transform_7(%arg0: i32) -> (i32, i32) {
    %c0_i32 = arith.constant 0 : i32
    %c0_i32_0 = arith.constant 0 : i32
    %c0_i32_1 = arith.constant 0 : i32
    return %c0_i32, %c0_i32_0 : i32, i32
  }
  func.func @transform_8(%arg0: i32) -> (i32, i32) {
    %c0_i32 = arith.constant 0 : i32
    %c0_i32_0 = arith.constant 0 : i32
    %c0_i32_1 = arith.constant 0 : i32
    return %c0_i32, %c0_i32_0 : i32, i32
  }
  func.func @transform_9(%arg0: i32) -> (i32, i32) {
    %c0_i32 = arith.constant 0 : i32
    %c0_i32_0 = arith.constant 0 : i32
    return %arg0, %c0_i32 : i32, i32
  }
  func.func @transform_10(%arg0: i32) -> (i32, i32) {
    %c0_i32 = arith.constant 0 : i32
    %c0_i32_0 = arith.constant 0 : i32
    return %arg0, %c0_i32 : i32, i32
  }
}

module attributes {stable_mosaic.version = 11 : i64} {
  func.func @_first_inference_kernel(%arg0: i32, %arg1: memref<8x128xf32, #tpu.memory_space<vmem>>, %arg2: memref<128x128xf32, #tpu.memory_space<vmem>>, %arg3: memref<1x128xf32, #tpu.memory_space<vmem>>, %arg4: memref<128x128xf32, #tpu.memory_space<vmem>>, %arg5: memref<1x128xf32, #tpu.memory_space<vmem>>, %arg6: memref<128x128xf32, #tpu.memory_space<vmem>>, %arg7: memref<1x128xf32, #tpu.memory_space<vmem>>, %arg8: memref<128x256xf32, #tpu.memory_space<vmem>>, %arg9: memref<1x256xf32, #tpu.memory_space<vmem>>, %arg10: memref<8x128xf32, #tpu.memory_space<vmem>>, %arg11: memref<8x128xf32, #tpu.memory_space<vmem>>) attributes {dimension_semantics = [#tpu.dimension_semantics<parallel>], iteration_bounds = array<i64: 1>, scalar_prefetch = 0 : i64, scratch_operands = 0 : i64, tpu.core_type = #tpu.core_type<tc>, window_params = [{transform_indices = @transform_0, window_bounds = array<i64: 8, 128>}, {pipeline_mode = #tpu.pipeline_mode<synchronous>, transform_indices = @transform_1, window_bounds = array<i64: 128, 128>}, {pipeline_mode = #tpu.pipeline_mode<synchronous>, transform_indices = @transform_2, window_bounds = array<i64: 1, 128>}, {pipeline_mode = #tpu.pipeline_mode<synchronous>, transform_indices = @transform_3, window_bounds = array<i64: 128, 128>}, {pipeline_mode = #tpu.pipeline_mode<synchronous>, transform_indices = @transform_4, window_bounds = array<i64: 1, 128>}, {pipeline_mode = #tpu.pipeline_mode<synchronous>, transform_indices = @transform_5, window_bounds = array<i64: 128, 128>}, {pipeline_mode = #tpu.pipeline_mode<synchronous>, transform_indices = @transform_6, window_bounds = array<i64: 1, 128>}, {pipeline_mode = #tpu.pipeline_mode<synchronous>, transform_indices = @transform_7, window_bounds = array<i64: 128, 256>}, {pipeline_mode = #tpu.pipeline_mode<synchronous>, transform_indices = @transform_8, window_bounds = array<i64: 1, 256>}, {transform_indices = @transform_9, window_bounds = array<i64: 8, 128>}, {transform_indices = @transform_10, window_bounds = array<i64: 8, 128>}]} {
    %c0 = arith.constant 0 : index
    %c0_0 = arith.constant 0 : index
    %0 = vector.load %arg1[%c0, %c0_0] : memref<8x128xf32, #tpu.memory_space<vmem>>, vector<8x128xf32>
    %c0_1 = arith.constant 0 : index
    %c0_2 = arith.constant 0 : index
    %1 = vector.load %arg2[%c0_1, %c0_2] : memref<128x128xf32, #tpu.memory_space<vmem>>, vector<128x128xf32>
    %cst = arith.constant dense<0.000000e+00> : vector<8x128xf32>
    %2 = tpu.matmul %0, %1, %cst {dimension_numbers = #tpu.dot_dimension_numbers<[1], [0], [0], [1], [0, 0, 1, 1], [], []>} : vector<8x128xf32>, vector<128x128xf32>, vector<8x128xf32> -> vector<8x128xf32>
    %c0_3 = arith.constant 0 : index
    %c0_4 = arith.constant 0 : index
    %3 = vector.load %arg3[%c0_3, %c0_4] : memref<1x128xf32, #tpu.memory_space<vmem>>, vector<1x128xf32>
    %4 = vector.broadcast %3 : vector<1x128xf32> to vector<8x128xf32>
    %5 = arith.addf %2, %4 : vector<8x128xf32>
    %6 = math.tanh %5 : vector<8x128xf32>
    %c0_5 = arith.constant 0 : index
    %c0_6 = arith.constant 0 : index
    %7 = vector.load %arg4[%c0_5, %c0_6] : memref<128x128xf32, #tpu.memory_space<vmem>>, vector<128x128xf32>
    %cst_7 = arith.constant dense<0.000000e+00> : vector<8x128xf32>
    %8 = tpu.matmul %6, %7, %cst_7 {dimension_numbers = #tpu.dot_dimension_numbers<[1], [0], [0], [1], [0, 0, 1, 1], [], []>} : vector<8x128xf32>, vector<128x128xf32>, vector<8x128xf32> -> vector<8x128xf32>
    %c0_8 = arith.constant 0 : index
    %c0_9 = arith.constant 0 : index
    %9 = vector.load %arg5[%c0_8, %c0_9] : memref<1x128xf32, #tpu.memory_space<vmem>>, vector<1x128xf32>
    %10 = vector.broadcast %9 : vector<1x128xf32> to vector<8x128xf32>
    %11 = arith.addf %8, %10 : vector<8x128xf32>
    %12 = math.tanh %11 : vector<8x128xf32>
    %c0_10 = arith.constant 0 : index
    %c0_11 = arith.constant 0 : index
    %13 = vector.load %arg6[%c0_10, %c0_11] : memref<128x128xf32, #tpu.memory_space<vmem>>, vector<128x128xf32>
    %cst_12 = arith.constant dense<0.000000e+00> : vector<8x128xf32>
    %14 = tpu.matmul %12, %13, %cst_12 {dimension_numbers = #tpu.dot_dimension_numbers<[1], [0], [0], [1], [0, 0, 1, 1], [], []>} : vector<8x128xf32>, vector<128x128xf32>, vector<8x128xf32> -> vector<8x128xf32>
    %c0_13 = arith.constant 0 : index
    %c0_14 = arith.constant 0 : index
    %15 = vector.load %arg7[%c0_13, %c0_14] : memref<1x128xf32, #tpu.memory_space<vmem>>, vector<1x128xf32>
    %16 = vector.broadcast %15 : vector<1x128xf32> to vector<8x128xf32>
    %17 = arith.addf %14, %16 : vector<8x128xf32>
    %18 = math.tanh %17 : vector<8x128xf32>
    %c0_15 = arith.constant 0 : index
    %c0_16 = arith.constant 0 : index
    %19 = vector.load %arg8[%c0_15, %c0_16] : memref<128x256xf32, #tpu.memory_space<vmem>>, vector<128x256xf32>
    %cst_17 = arith.constant dense<0.000000e+00> : vector<8x256xf32>
    %20 = tpu.matmul %18, %19, %cst_17 {dimension_numbers = #tpu.dot_dimension_numbers<[1], [0], [0], [1], [0, 0, 1, 1], [], []>} : vector<8x128xf32>, vector<128x256xf32>, vector<8x256xf32> -> vector<8x256xf32>
    %c0_18 = arith.constant 0 : index
    %c0_19 = arith.constant 0 : index
    %21 = vector.load %arg9[%c0_18, %c0_19] : memref<1x256xf32, #tpu.memory_space<vmem>>, vector<1x256xf32>
    %22 = vector.broadcast %21 : vector<1x256xf32> to vector<8x256xf32>
    %23 = arith.addf %20, %22 : vector<8x256xf32>
    %24 = vector.extract_strided_slice %23 {offsets = [0, 0], sizes = [8, 128], strides = [1, 1]} : vector<8x256xf32> to vector<8x128xf32>
    %25 = math.tanh %24 : vector<8x128xf32>
    %cst_20 = arith.constant 1.000000e+01 : f32
    %26 = vector.broadcast %cst_20 : f32 to vector<8x128xf32>
    %27 = arith.mulf %26, %25 : vector<8x128xf32>
    %c0_21 = arith.constant 0 : index
    %c0_22 = arith.constant 0 : index
    %28 = vector.load %arg10[%c0_21, %c0_22] : memref<8x128xf32, #tpu.memory_space<vmem>>, vector<8x128xf32>
    tpu.vector_store %arg10[%c0_21, %c0_22], %27 {strides = array<i32>} : memref<8x128xf32, #tpu.memory_space<vmem>>, vector<8x128xf32>,
    %29 = vector.extract_strided_slice %23 {offsets = [0, 128], sizes = [8, 128], strides = [1, 1]} : vector<8x256xf32> to vector<8x128xf32>
    %30 = arith.negf %29 : vector<8x128xf32>
    %31 = math.exp %30 : vector<8x128xf32>
    %cst_23 = arith.constant 1.000000e+00 : f32
    %32 = vector.broadcast %cst_23 : f32 to vector<8x128xf32>
    %33 = arith.addf %32, %31 : vector<8x128xf32>
    %34 = arith.divf %32, %33 : vector<8x128xf32>
    %cst_24 = arith.constant 9.99999997E-7 : f32
    %35 = vector.broadcast %cst_24 : f32 to vector<8x128xf32>
    %36 = arith.addf %34, %35 : vector<8x128xf32>
    %c0_25 = arith.constant 0 : index
    %c0_26 = arith.constant 0 : index
    %37 = vector.load %arg11[%c0_25, %c0_26] : memref<8x128xf32, #tpu.memory_space<vmem>>, vector<8x128xf32>
    tpu.vector_store %arg11[%c0_25, %c0_26], %36 {strides = array<i32>} : memref<8x128xf32, #tpu.memory_space<vmem>>, vector<8x128xf32>,
    return
  }
  func.func @transform_0(%arg0: i32) -> (i32, i32) {
    %c0_i32 = arith.constant 0 : i32
    %c0_i32_0 = arith.constant 0 : i32
    return %arg0, %c0_i32 : i32, i32
  }
  func.func @transform_1(%arg0: i32) -> (i32, i32) {
    %c0_i32 = arith.constant 0 : i32
    %c0_i32_0 = arith.constant 0 : i32
    %c0_i32_1 = arith.constant 0 : i32
    return %c0_i32, %c0_i32_0 : i32, i32
  }
  func.func @transform_2(%arg0: i32) -> (i32, i32) {
    %c0_i32 = arith.constant 0 : i32
    %c0_i32_0 = arith.constant 0 : i32
    %c0_i32_1 = arith.constant 0 : i32
    return %c0_i32, %c0_i32_0 : i32, i32
  }
  func.func @transform_3(%arg0: i32) -> (i32, i32) {
    %c0_i32 = arith.constant 0 : i32
    %c0_i32_0 = arith.constant 0 : i32
    %c0_i32_1 = arith.constant 0 : i32
    return %c0_i32, %c0_i32_0 : i32, i32
  }
  func.func @transform_4(%arg0: i32) -> (i32, i32) {
    %c0_i32 = arith.constant 0 : i32
    %c0_i32_0 = arith.constant 0 : i32
    %c0_i32_1 = arith.constant 0 : i32
    return %c0_i32, %c0_i32_0 : i32, i32
  }
  func.func @transform_5(%arg0: i32) -> (i32, i32) {
    %c0_i32 = arith.constant 0 : i32
    %c0_i32_0 = arith.constant 0 : i32
    %c0_i32_1 = arith.constant 0 : i32
    return %c0_i32, %c0_i32_0 : i32, i32
  }
  func.func @transform_6(%arg0: i32) -> (i32, i32) {
    %c0_i32 = arith.constant 0 : i32
    %c0_i32_0 = arith.constant 0 : i32
    %c0_i32_1 = arith.constant 0 : i32
    return %c0_i32, %c0_i32_0 : i32, i32
  }
  func.func @transform_7(%arg0: i32) -> (i32, i32) {
    %c0_i32 = arith.constant 0 : i32
    %c0_i32_0 = arith.constant 0 : i32
    %c0_i32_1 = arith.constant 0 : i32
    return %c0_i32, %c0_i32_0 : i32, i32
  }
  func.func @transform_8(%arg0: i32) -> (i32, i32) {
    %c0_i32 = arith.constant 0 : i32
    %c0_i32_0 = arith.constant 0 : i32
    %c0_i32_1 = arith.constant 0 : i32
    return %c0_i32, %c0_i32_0 : i32, i32
  }
  func.func @transform_9(%arg0: i32) -> (i32, i32) {
    %c0_i32 = arith.constant 0 : i32
    %c0_i32_0 = arith.constant 0 : i32
    return %arg0, %c0_i32 : i32, i32
  }
  func.func @transform_10(%arg0: i32) -> (i32, i32) {
    %c0_i32 = arith.constant 0 : i32
    %c0_i32_0 = arith.constant 0 : i32
    return %arg0, %c0_i32 : i32, i32
  }
}

</mosaic_0001>

<llo_original>
// kernel: tpu_custom_call.1
$region0: #{tpu_custom_call.1}
  #allocation0 [shape = 'u32[]', space=smem, size = 0x4, offset = 0x4, fixed_abs, tag = 'smem constant byte address 0x4 - core index']
  #allocation1 [shape = 'u32[72,128]{1,0:T(1,128)}', space=vmem, size = 0x9000, scoped, tag = 'internal scratch']
  %s0 = inlined_call_operand.hbm [shape: f32[8,128], index: 0, kind: input, shape index: {}]
  %s1 = inlined_call_operand.hbm [shape: f32[128,128], index: 1, kind: input, shape index: {}]
  %s2 = inlined_call_operand.vmem [shape: f32[1,128], index: 2, kind: input, shape index: {}]
  %s3 = inlined_call_operand.hbm [shape: f32[128,128], index: 3, kind: input, shape index: {}]
  %s4 = inlined_call_operand.hbm [shape: f32[1,128], index: 4, kind: input, shape index: {}]
  %s5 = inlined_call_operand.hbm [shape: f32[128,128], index: 5, kind: input, shape index: {}]
  %s6 = inlined_call_operand.vmem [shape: f32[1,128], index: 6, kind: input, shape index: {}]
  %s7 = inlined_call_operand.hbm [shape: f32[128,256], index: 7, kind: input, shape index: {}]
  %s8 = inlined_call_operand.vmem [shape: f32[1,256], index: 8, kind: input, shape index: {}]
  %s9 = inlined_call_operand.hbm [shape: f32[8,128], index: 9, kind: output, shape index: {0}]
  %s10 = inlined_call_operand.hbm [shape: f32[8,128], index: 10, kind: output, shape index: {1}]
  %11 = xla_tuple %s9, %s10
  %s12 = sld [smem:[#allocation0]]
  $region78: #{tpu_custom_call.1} parent=0
    _
  %s14 = ssub.s32 1, %s12
  %s15 = scalar_select 0, %s14, %s12
  $region1: #{tpu_custom_call.1} parent=0
    #allocation2 [shape = 'u8[4096]{0}', space=vmem, size = 0x1000, scoped, tag = 'input window, operand 0, single buffered']
    #allocation3 [shape = 's32[1]{0}', space=sflag, size = 0x4, scoped, tag = 'scoped memory for tpu_custom_call.1']
    #allocation4 [shape = 's32[1]{0}', space=sflag, size = 0x4, scoped, tag = 'scoped memory for tpu_custom_call.1']
    #allocation5 [shape = 'u8[65536]{0}', space=vmem, size = 0x10000, scoped, tag = 'input window, operand 1, single buffered']
    #allocation6 [shape = 's32[1]{0}', space=sflag, size = 0x4, scoped, tag = 'scoped memory for tpu_custom_call.1']
    #allocation7 [shape = 'u8[65536]{0}', space=vmem, size = 0x10000, scoped, tag = 'input window, operand 3, single buffered']
    #allocation8 [shape = 'u8[512]{0}', space=vmem, size = 0x400, scoped, tag = 'input window, operand 4, single buffered']
    #allocation9 [shape = 's32[1]{0}', space=sflag, size = 0x4, scoped, tag = 'scoped memory for tpu_custom_call.1']
    #allocation10 [shape = 'u8[65536]{0}', space=vmem, size = 0x10000, scoped, tag = 'input window, operand 5, single buffered']
    #allocation11 [shape = 'u8[131072]{0}', space=vmem, size = 0x20000, scoped, tag = 'input window, operand 7, single buffered']
    #allocation12 [shape = 's32[1]{0}', space=sflag, size = 0x4, scoped, tag = 'scoped memory for tpu_custom_call.1']
    #allocation13 [shape = 'u8[4096]{0}', space=vmem, size = 0x1000, scoped, tag = 'output window, operand 0, single buffered']
    #allocation14 [shape = 'u8[4096]{0}', space=vmem, size = 0x1000, scoped, tag = 'output window, operand 1, single buffered']
    #allocation15 [shape = 's32[1]{0}', space=sflag, size = 0x4, scoped, tag = 'scoped memory for tpu_custom_call.1']
    %16 = vsyncpa [#allocation3], 0
    %17 = vsyncpa [#allocation6], 0
    %18 = vsyncpa [#allocation9], 0
    %19 = vsyncpa [#allocation12], 0
    %20 = vsyncpa [#allocation4], 0
    %21 = vsyncpa [#allocation15], 0
    // Predicated region
    $region2: #{tpu_custom_call.1} parent=1 // pred_check
      _
    $region3: #{tpu_custom_call.1} parent=1 // pred_check_branch
      %23 = sbr.rel (0) target = $region5
    $region4: #{tpu_custom_call.1} parent=1 // pred_region
      %25 = vsyncadd [#allocation3], 0
      %s27 = sshll.u32 %s0, 4
      %s28 = int_to_ptr.hbm [resolvable:$true] %s27
      %s29 = sshll.u32 [#allocation2], 4
      %s30 = int_to_ptr.vmem [resolvable:$true] %s29
      %32 = dma.hbm_to_vmem [thread:$0]  %s28, 128, %s30, [#allocation3]
    $region5: #{tpu_custom_call.1} parent=1 // pred_fallthru
      _
    // Predicated region
    $region6: #{tpu_custom_call.1} parent=1 // pred_check
      _
    $region7: #{tpu_custom_call.1} parent=1 // pred_check_branch
      %34 = sbr.rel (0) target = $region9
    $region8: #{tpu_custom_call.1} parent=1 // pred_region
      %36 = vsyncadd [#allocation6], 0
      %s37 = sshll.u32 %s1, 4
      %s38 = int_to_ptr.hbm [resolvable:$true] %s37
      %s39 = sshll.u32 [#allocation5], 4
      %s40 = int_to_ptr.vmem [resolvable:$true] %s39
      %45 = dma.hbm_to_vmem [thread:$0]  %s38, 2048, %s40, [#allocation6], 128, 128, 8
    $region9: #{tpu_custom_call.1} parent=1 // pred_fallthru
      _
    // Predicated region
    $region10: #{tpu_custom_call.1} parent=1 // pred_check
      _
    $region11: #{tpu_custom_call.1} parent=1 // pred_check_branch
      %47 = sbr.rel (0) target = $region13
    $region12: #{tpu_custom_call.1} parent=1 // pred_region
      _
    $region13: #{tpu_custom_call.1} parent=1 // pred_fallthru
      _
    // Predicated region
    $region14: #{tpu_custom_call.1} parent=1 // pred_check
      _
    $region15: #{tpu_custom_call.1} parent=1 // pred_check_branch
      %49 = sbr.rel (0) target = $region17
    $region16: #{tpu_custom_call.1} parent=1 // pred_region
      %51 = vsyncadd [#allocation6], 0
      %s52 = sshll.u32 %s3, 4
      %s53 = int_to_ptr.hbm [resolvable:$true] %s52
      %s54 = sshll.u32 [#allocation7], 4
      %s55 = int_to_ptr.vmem [resolvable:$true] %s54
      %60 = dma.hbm_to_vmem [thread:$0]  %s53, 2048, %s55, [#allocation6], 128, 128, 8
    $region17: #{tpu_custom_call.1} parent=1 // pred_fallthru
      _
    // Predicated region
    $region18: #{tpu_custom_call.1} parent=1 // pred_check
      _
    $region19: #{tpu_custom_call.1} parent=1 // pred_check_branch
      %62 = sbr.rel (0) target = $region21
    $region20: #{tpu_custom_call.1} parent=1 // pred_region
      %64 = vsyncadd [#allocation9], 0
      %s66 = sshll.u32 %s4, 4
      %s67 = int_to_ptr.hbm [resolvable:$true] %s66
      %s68 = sshll.u32 [#allocation8], 4
      %s69 = int_to_ptr.vmem [resolvable:$true] %s68
      %71 = dma.hbm_to_vmem [thread:$0]  %s67, 16, %s69, [#allocation9]
    $region21: #{tpu_custom_call.1} parent=1 // pred_fallthru
      _
    // Predicated region
    $region22: #{tpu_custom_call.1} parent=1 // pred_check
      _
    $region23: #{tpu_custom_call.1} parent=1 // pred_check_branch
      %73 = sbr.rel (0) target = $region25
    $region24: #{tpu_custom_call.1} parent=1 // pred_region
      %75 = vsyncadd [#allocation9], 0
      %s76 = sshll.u32 %s5, 4
      %s77 = int_to_ptr.hbm [resolvable:$true] %s76
      %s78 = sshll.u32 [#allocation10], 4
      %s79 = int_to_ptr.vmem [resolvable:$true] %s78
      %84 = dma.hbm_to_vmem [thread:$0]  %s77, 2048, %s79, [#allocation9], 128, 128, 8
    $region25: #{tpu_custom_call.1} parent=1 // pred_fallthru
      _
    // Predicated region
    $region26: #{tpu_custom_call.1} parent=1 // pred_check
      _
    $region27: #{tpu_custom_call.1} parent=1 // pred_check_branch
      %86 = sbr.rel (0) target = $region29
    $region28: #{tpu_custom_call.1} parent=1 // pred_region
      _
    $region29: #{tpu_custom_call.1} parent=1 // pred_fallthru
      _
    // Predicated region
    $region30: #{tpu_custom_call.1} parent=1 // pred_check
      _
    $region31: #{tpu_custom_call.1} parent=1 // pred_check_branch
      %88 = sbr.rel (0) target = $region33
    $region32: #{tpu_custom_call.1} parent=1 // pred_region
      %90 = vsyncadd [#allocation12], 0
      %s91 = sshll.u32 %s7, 4
      %s92 = int_to_ptr.hbm [resolvable:$true] %s91
      %s93 = sshll.u32 [#allocation11], 4
      %s94 = int_to_ptr.vmem [resolvable:$true] %s93
      %99 = dma.hbm_to_vmem [thread:$0]  %s92, 4096, %s94, [#allocation12], 256, 256, 16
    $region33: #{tpu_custom_call.1} parent=1 // pred_fallthru
      _
    // Predicated region
    $region34: #{tpu_custom_call.1} parent=1 // pred_check
      _
    $region35: #{tpu_custom_call.1} parent=1 // pred_check_branch
      %101 = sbr.rel (0) target = $region37
    $region36: #{tpu_custom_call.1} parent=1 // pred_region
      _
    $region37: #{tpu_custom_call.1} parent=1 // pred_fallthru
      _
    // Predicated region
    $region38: #{tpu_custom_call.1} parent=1 // pred_check
      _
    $region39: #{tpu_custom_call.1} parent=1 // pred_check_branch
      %103 = sbr.rel (0) target = $region41
    $region40: #{tpu_custom_call.1} parent=1 // pred_region
      %105 = dma.done [#allocation3], 128
    $region41: #{tpu_custom_call.1} parent=1 // pred_fallthru
      _
    // Predicated region
    $region42: #{tpu_custom_call.1} parent=1 // pred_check
      _
    $region43: #{tpu_custom_call.1} parent=1 // pred_check_branch
      %107 = sbr.rel (0) target = $region45
    $region44: #{tpu_custom_call.1} parent=1 // pred_region
      %109 = dma.done [#allocation6], 2048
    $region45: #{tpu_custom_call.1} parent=1 // pred_fallthru
      _
    // Predicated region
    $region46: #{tpu_custom_call.1} parent=1 // pred_check
      _
    $region47: #{tpu_custom_call.1} parent=1 // pred_check_branch
      %111 = sbr.rel (0) target = $region49
    $region48: #{tpu_custom_call.1} parent=1 // pred_region
      %113 = dma.done [#allocation6], 2048
    $region49: #{tpu_custom_call.1} parent=1 // pred_fallthru
      _
    // Predicated region
    $region50: #{tpu_custom_call.1} parent=1 // pred_check
      _
    $region51: #{tpu_custom_call.1} parent=1 // pred_check_branch
      %115 = sbr.rel (0) target = $region53
    $region52: #{tpu_custom_call.1} parent=1 // pred_region
      %117 = dma.done [#allocation9], 16
    $region53: #{tpu_custom_call.1} parent=1 // pred_fallthru
      _
    // Predicated region
    $region54: #{tpu_custom_call.1} parent=1 // pred_check
      _
    $region55: #{tpu_custom_call.1} parent=1 // pred_check_branch
      %119 = sbr.rel (0) target = $region57
    $region56: #{tpu_custom_call.1} parent=1 // pred_region
      %121 = dma.done [#allocation9], 2048
    $region57: #{tpu_custom_call.1} parent=1 // pred_fallthru
      _
    // Predicated region
    $region58: #{tpu_custom_call.1} parent=1 // pred_check
      _
    $region59: #{tpu_custom_call.1} parent=1 // pred_check_branch
      %123 = sbr.rel (0) target = $region61
    $region60: #{tpu_custom_call.1} parent=1 // pred_region
      %125 = dma.done [#allocation12], 4096
    $region61: #{tpu_custom_call.1} parent=1 // pred_fallthru
      _
    %v126 = vld [vmem:[#allocation2] sm:$0xff]
    %v127 = vld [vmem:[#allocation5] sm:$0xff]
    %v128 = vld [vmem:[#allocation5 + $0x8] sm:$0xff]
    %v129 = vld [vmem:[#allocation5 + $0x10] sm:$0xff]
    %v130 = vld [vmem:[#allocation5 + $0x18] sm:$0xff]
    %v131 = vld [vmem:[#allocation5 + $0x20] sm:$0xff]
    %v132 = vld [vmem:[#allocation5 + $0x28] sm:$0xff]
    %v133 = vld [vmem:[#allocation5 + $0x30] sm:$0xff]
    %v134 = vld [vmem:[#allocation5 + $0x38] sm:$0xff]
    %v135 = vld [vmem:[#allocation5 + $0x40] sm:$0xff]
    %v136 = vld [vmem:[#allocation5 + $0x48] sm:$0xff]
    %v137 = vld [vmem:[#allocation5 + $0x50] sm:$0xff]
    %v138 = vld [vmem:[#allocation5 + $0x58] sm:$0xff]
    %v139 = vld [vmem:[#allocation5 + $0x60] sm:$0xff]
    %v140 = vld [vmem:[#allocation5 + $0x68] sm:$0xff]
    %v141 = vld [vmem:[#allocation5 + $0x70] sm:$0xff]
    %v142 = vld [vmem:[#allocation5 + $0x78] sm:$0xff]
    %v143 = vld [vmem:[%s2] sm:$0x1]
    %v145 = vperm.slane %v143, 0
    %147 = vmatpush.msra.mxu0 %v142
    %148 = vmatpush.msra.mxu0 %v141
    %149 = vmatpush.msra.mxu0 %v140
    %150 = vmatpush.msra.mxu0 %v139
    %151 = vmatpush.msra.mxu0 %v138
    %152 = vmatpush.msra.mxu0 %v137
    %153 = vmatpush.msra.mxu0 %v136
    %154 = vmatpush.msra.mxu0 %v135
    %155 = vmatpush.msra.mxu0 %v134
    %156 = vmatpush.msra.mxu0 %v133
    %157 = vmatpush.msra.mxu0 %v132
    %158 = vmatpush.msra.mxu0 %v131
    %159 = vmatpush.msra.mxu0 %v130
    %160 = vmatpush.msra.mxu0 %v129
    %161 = vmatpush.msra.mxu0 %v128
    %162 = vmatpush.msra.mxu0 %v127
    %163 = vmatmul.f32.gmra.mxu0 %v126
    %v164 = vpop.f32.mrf.mxu0
    %v165 = vadd.f32 %v145, %v164
    %166 = vdwg.mxu0
    %v167 = vtanh.pop %v165
    %v168 = vld [vmem:[#allocation7] sm:$0xff]
    %v169 = vld [vmem:[#allocation7 + $0x8] sm:$0xff]
    %v170 = vld [vmem:[#allocation7 + $0x10] sm:$0xff]
    %v171 = vld [vmem:[#allocation7 + $0x18] sm:$0xff]
    %v172 = vld [vmem:[#allocation7 + $0x20] sm:$0xff]
    %v173 = vld [vmem:[#allocation7 + $0x28] sm:$0xff]
    %v174 = vld [vmem:[#allocation7 + $0x30] sm:$0xff]
    %v175 = vld [vmem:[#allocation7 + $0x38] sm:$0xff]
    %v176 = vld [vmem:[#allocation7 + $0x40] sm:$0xff]
    %v177 = vld [vmem:[#allocation7 + $0x48] sm:$0xff]
    %v178 = vld [vmem:[#allocation7 + $0x50] sm:$0xff]
    %v179 = vld [vmem:[#allocation7 + $0x58] sm:$0xff]
    %v180 = vld [vmem:[#allocation7 + $0x60] sm:$0xff]
    %v181 = vld [vmem:[#allocation7 + $0x68] sm:$0xff]
    %v182 = vld [vmem:[#allocation7 + $0x70] sm:$0xff]
    %v183 = vld [vmem:[#allocation7 + $0x78] sm:$0xff]
    %v184 = vld [vmem:[#allocation8] sm:$0x1]
    %v186 = vperm.slane %v184, 0
    %188 = vmatpush.msra.mxu0 %v183
    %189 = vmatpush.msra.mxu0 %v182
    %190 = vmatpush.msra.mxu0 %v181
    %191 = vmatpush.msra.mxu0 %v180
    %192 = vmatpush.msra.mxu0 %v179
    %193 = vmatpush.msra.mxu0 %v178
    %194 = vmatpush.msra.mxu0 %v177
    %195 = vmatpush.msra.mxu0 %v176
    %196 = vmatpush.msra.mxu0 %v175
    %197 = vmatpush.msra.mxu0 %v174
    %198 = vmatpush.msra.mxu0 %v173
    %199 = vmatpush.msra.mxu0 %v172
    %200 = vmatpush.msra.mxu0 %v171
    %201 = vmatpush.msra.mxu0 %v170
    %202 = vmatpush.msra.mxu0 %v169
    %203 = vmatpush.msra.mxu0 %v168
    %204 = vmatmul.f32.gmra.mxu0 %v167
    %v205 = vpop.f32.mrf.mxu0
    %v206 = vadd.f32 %v186, %v205
    %207 = vdwg.mxu0
    %v208 = vtanh.pop %v206
    %v209 = vld [vmem:[#allocation10] sm:$0xff]
    %v210 = vld [vmem:[#allocation10 + $0x8] sm:$0xff]
    %v211 = vld [vmem:[#allocation10 + $0x10] sm:$0xff]
    %v212 = vld [vmem:[#allocation10 + $0x18] sm:$0xff]
    %v213 = vld [vmem:[#allocation10 + $0x20] sm:$0xff]
    %v214 = vld [vmem:[#allocation10 + $0x28] sm:$0xff]
    %v215 = vld [vmem:[#allocation10 + $0x30] sm:$0xff]
    %v216 = vld [vmem:[#allocation10 + $0x38] sm:$0xff]
    %v217 = vld [vmem:[#allocation10 + $0x40] sm:$0xff]
    %v218 = vld [vmem:[#allocation10 + $0x48] sm:$0xff]
    %v219 = vld [vmem:[#allocation10 + $0x50] sm:$0xff]
    %v220 = vld [vmem:[#allocation10 + $0x58] sm:$0xff]
    %v221 = vld [vmem:[#allocation10 + $0x60] sm:$0xff]
    %v222 = vld [vmem:[#allocation10 + $0x68] sm:$0xff]
    %v223 = vld [vmem:[#allocation10 + $0x70] sm:$0xff]
    %v224 = vld [vmem:[#allocation10 + $0x78] sm:$0xff]
    %v225 = vld [vmem:[%s6] sm:$0x1]
    %v227 = vperm.slane %v225, 0
    %229 = vmatpush.msra.mxu0 %v224
    %230 = vmatpush.msra.mxu0 %v223
    %231 = vmatpush.msra.mxu0 %v222
    %232 = vmatpush.msra.mxu0 %v221
    %233 = vmatpush.msra.mxu0 %v220
    %234 = vmatpush.msra.mxu0 %v219
    %235 = vmatpush.msra.mxu0 %v218
    %236 = vmatpush.msra.mxu0 %v217
    %237 = vmatpush.msra.mxu0 %v216
    %238 = vmatpush.msra.mxu0 %v215
    %239 = vmatpush.msra.mxu0 %v214
    %240 = vmatpush.msra.mxu0 %v213
    %241 = vmatpush.msra.mxu0 %v212
    %242 = vmatpush.msra.mxu0 %v211
    %243 = vmatpush.msra.mxu0 %v210
    %244 = vmatpush.msra.mxu0 %v209
    %245 = vmatmul.f32.gmra.mxu0 %v208
    %v246 = vpop.f32.mrf.mxu0
    %v247 = vadd.f32 %v227, %v246
    %248 = vdwg.mxu0
    %v249 = vtanh.pop %v247
    %v250 = vld [vmem:[#allocation11] sm:$0xff]
    %v251 = vld [vmem:[#allocation11 + $0x8] sm:$0xff]
    %v252 = vld [vmem:[#allocation11 + $0x10] sm:$0xff]
    %v253 = vld [vmem:[#allocation11 + $0x18] sm:$0xff]
    %v254 = vld [vmem:[#allocation11 + $0x20] sm:$0xff]
    %v255 = vld [vmem:[#allocation11 + $0x28] sm:$0xff]
    %v256 = vld [vmem:[#allocation11 + $0x30] sm:$0xff]
    %v257 = vld [vmem:[#allocation11 + $0x38] sm:$0xff]
    %v258 = vld [vmem:[#allocation11 + $0x40] sm:$0xff]
    %v259 = vld [vmem:[#allocation11 + $0x48] sm:$0xff]
    %v260 = vld [vmem:[#allocation11 + $0x50] sm:$0xff]
    %v261 = vld [vmem:[#allocation11 + $0x58] sm:$0xff]
    %v262 = vld [vmem:[#allocation11 + $0x60] sm:$0xff]
    %v263 = vld [vmem:[#allocation11 + $0x68] sm:$0xff]
    %v264 = vld [vmem:[#allocation11 + $0x70] sm:$0xff]
    %v265 = vld [vmem:[#allocation11 + $0x78] sm:$0xff]
    %v266 = vld [vmem:[#allocation11 + $0x80] sm:$0xff]
    %v267 = vld [vmem:[#allocation11 + $0x88] sm:$0xff]
    %v268 = vld [vmem:[#allocation11 + $0x90] sm:$0xff]
    %v269 = vld [vmem:[#allocation11 + $0x98] sm:$0xff]
    %v270 = vld [vmem:[#allocation11 + $0xa0] sm:$0xff]
    %v271 = vld [vmem:[#allocation11 + $0xa8] sm:$0xff]
    %v272 = vld [vmem:[#allocation11 + $0xb0] sm:$0xff]
    %v273 = vld [vmem:[#allocation11 + $0xb8] sm:$0xff]
    %v274 = vld [vmem:[#allocation11 + $0xc0] sm:$0xff]
    %v275 = vld [vmem:[#allocation11 + $0xc8] sm:$0xff]
    %v276 = vld [vmem:[#allocation11 + $0xd0] sm:$0xff]
    %v277 = vld [vmem:[#allocation11 + $0xd8] sm:$0xff]
    %v278 = vld [vmem:[#allocation11 + $0xe0] sm:$0xff]
    %v279 = vld [vmem:[#allocation11 + $0xe8] sm:$0xff]
    %v280 = vld [vmem:[#allocation11 + $0xf0] sm:$0xff]
    %v281 = vld [vmem:[#allocation11 + $0xf8] sm:$0xff]
    %v282 = vld [vmem:[%s8] sm:$0x3]
    %v284 = vperm.slane %v282, 0
    %v285 = vperm.slane %v282, 1
    %288 = vmatpush.msra.mxu0 %v280
    %289 = vmatpush.msra.mxu0 %v278
    %290 = vmatpush.msra.mxu0 %v276
    %291 = vmatpush.msra.mxu0 %v274
    %292 = vmatpush.msra.mxu0 %v272
    %293 = vmatpush.msra.mxu0 %v270
    %294 = vmatpush.msra.mxu0 %v268
    %295 = vmatpush.msra.mxu0 %v266
    %296 = vmatpush.msra.mxu0 %v264
    %297 = vmatpush.msra.mxu0 %v262
    %298 = vmatpush.msra.mxu0 %v260
    %299 = vmatpush.msra.mxu0 %v258
    %300 = vmatpush.msra.mxu0 %v256
    %301 = vmatpush.msra.mxu0 %v254
    %302 = vmatpush.msra.mxu0 %v252
    %303 = vmatpush.msra.mxu0 %v250
    %304 = vmatmul.f32.gmra.mxu0 %v249
    %v305 = vpop.f32.mrf.mxu0
    %v306 = vadd.f32 %v284, %v305
    %307 = vdwg.mxu0
    %308 = vmatpush.msra.mxu0 %v281
    %309 = vmatpush.msra.mxu0 %v279
    %310 = vmatpush.msra.mxu0 %v277
    %311 = vmatpush.msra.mxu0 %v275
    %312 = vmatpush.msra.mxu0 %v273
    %313 = vmatpush.msra.mxu0 %v271
    %314 = vmatpush.msra.mxu0 %v269
    %315 = vmatpush.msra.mxu0 %v267
    %316 = vmatpush.msra.mxu0 %v265
    %317 = vmatpush.msra.mxu0 %v263
    %318 = vmatpush.msra.mxu0 %v261
    %319 = vmatpush.msra.mxu0 %v259
    %320 = vmatpush.msra.mxu0 %v257
    %321 = vmatpush.msra.mxu0 %v255
    %322 = vmatpush.msra.mxu0 %v253
    %323 = vmatpush.msra.mxu0 %v251
    %324 = vmatmul.f32.gmra.mxu0 %v249
    %v325 = vpop.f32.mrf.mxu0
    %v326 = vadd.f32 %v285, %v325
    %327 = vdwg.mxu0
    %v328 = vtanh.pop %v306
    %v329 = vmul.f32 %v328, 10.0
    %330 = vst [vmem:[#allocation13] sm:$0xff] %v329
    %v331 = vxor.u32 %v326, 2147483648
    %v332 = vmul.f32 %v331, 1.442695
    %v333 = vpow.pop %v332
    %v334 = vadd.f32 %v333, 1.0
    %v335 = vrcp.pop %v334
    %v336 = vmul.f32 %v334, %v335
    %v337 = vsub.f32 1.0, %v336
    %v338 = vmul.f32 %v335, %v337
    %v339 = vadd.f32 %v335, %v338
    %vm340 = vweird.f32 %v334
    %vm341 = vweird.f32 %v335
    %vm342 = vmor %vm340, %vm341
    %v343 = vsel %vm342, %v335, %v339
    %v344 = vand.u32 2147483647, %v334
    %vm345 = vcmp.eq.f32.partialorder %v344, 8.507059e+37
    %v346 = vand.u32 %v334, 2147483648
    %v347 = vor.u32 1.1754944e-38, %v346
    %v348 = vsel %vm345, %v347, %v343
    %v349 = vmul.f32 1.0, %v348
    %v350 = vadd.f32 %v349, 1e-06
    %351 = vst [vmem:[#allocation14] sm:$0xff] %v350
    // Predicated region
    $region62: #{tpu_custom_call.1} parent=1 // pred_check
      _
    $region63: #{tpu_custom_call.1} parent=1 // pred_check_branch
      %353 = sbr.rel (0) target = $region65
    $region64: #{tpu_custom_call.1} parent=1 // pred_region
      %355 = vsyncadd [#allocation4], 0
      %s357 = sshll.u32 [#allocation13], 4
      %s358 = int_to_ptr.vmem [resolvable:$true] %s357
      %s359 = sshll.u32 %s9, 4
      %s360 = int_to_ptr.hbm [resolvable:$true] %s359
      %362 = dma.vmem_to_hbm [thread:$0]  %s358, 128, %s360, [#allocation4]
    $region65: #{tpu_custom_call.1} parent=1 // pred_fallthru
      _
    // Predicated region
    $region66: #{tpu_custom_call.1} parent=1 // pred_check
      _
    $region67: #{tpu_custom_call.1} parent=1 // pred_check_branch
      %364 = sbr.rel (0) target = $region69
    $region68: #{tpu_custom_call.1} parent=1 // pred_region
      %366 = vsyncadd [#allocation15], 0
      %s368 = sshll.u32 [#allocation14], 4
      %s369 = int_to_ptr.vmem [resolvable:$true] %s368
      %s370 = sshll.u32 %s10, 4
      %s371 = int_to_ptr.hbm [resolvable:$true] %s370
      %373 = dma.vmem_to_hbm [thread:$0]  %s369, 128, %s371, [#allocation15]
    $region69: #{tpu_custom_call.1} parent=1 // pred_fallthru
      _
    // Predicated region
    $region70: #{tpu_custom_call.1} parent=1 // pred_check
      _
    $region71: #{tpu_custom_call.1} parent=1 // pred_check_branch
      %375 = sbr.rel (0) target = $region73
    $region72: #{tpu_custom_call.1} parent=1 // pred_region
      %377 = dma.done [#allocation4], 128
    $region73: #{tpu_custom_call.1} parent=1 // pred_fallthru
      _
    // Predicated region
    $region74: #{tpu_custom_call.1} parent=1 // pred_check
      _
    $region75: #{tpu_custom_call.1} parent=1 // pred_check_branch
      %379 = sbr.rel (0) target = $region77
    $region76: #{tpu_custom_call.1} parent=1 // pred_region
      %381 = dma.done [#allocation15], 128
    $region77: #{tpu_custom_call.1} parent=1 // pred_fallthru
      _
    %382 = vsyncpa [#allocation3], 1
    %383 = vsyncpa [#allocation6], 1
    %384 = vsyncpa [#allocation9], 1
    %385 = vsyncpa [#allocation12], 1
    %386 = vsyncpa [#allocation4], 1
    %387 = vsyncpa [#allocation15], 1

// kernel: tpu_custom_call.1
$region0: #{tpu_custom_call.1}
  #allocation0 [shape = 'u32[]', space=smem, size = 0x4, offset = 0x4, fixed_abs, tag = 'smem constant byte address 0x4 - core index']
  #allocation1 [shape = 'u32[72,128]{1,0:T(1,128)}', space=vmem, size = 0x9000, scoped, tag = 'internal scratch']
  %s0 = inlined_call_operand.hbm [shape: f32[8,128], index: 0, kind: input, shape index: {}]
  %s1 = inlined_call_operand.hbm [shape: f32[128,128], index: 1, kind: input, shape index: {}]
  %s2 = inlined_call_operand.vmem [shape: f32[1,128], index: 2, kind: input, shape index: {}]
  %s3 = inlined_call_operand.hbm [shape: f32[128,128], index: 3, kind: input, shape index: {}]
  %s4 = inlined_call_operand.hbm [shape: f32[1,128], index: 4, kind: input, shape index: {}]
  %s5 = inlined_call_operand.hbm [shape: f32[128,128], index: 5, kind: input, shape index: {}]
  %s6 = inlined_call_operand.vmem [shape: f32[1,128], index: 6, kind: input, shape index: {}]
  %s7 = inlined_call_operand.hbm [shape: f32[128,256], index: 7, kind: input, shape index: {}]
  %s8 = inlined_call_operand.vmem [shape: f32[1,256], index: 8, kind: input, shape index: {}]
  %s9 = inlined_call_operand.hbm [shape: f32[8,128], index: 9, kind: output, shape index: {0}]
  %s10 = inlined_call_operand.hbm [shape: f32[8,128], index: 10, kind: output, shape index: {1}]
  %11 = xla_tuple %s9, %s10
  %s12 = sld [smem:[#allocation0]]
  $region78: #{tpu_custom_call.1} parent=0
    _
  %s14 = ssub.s32 1, %s12
  %s15 = scalar_select 0, %s14, %s12
  $region1: #{tpu_custom_call.1} parent=0
    #allocation2 [shape = 'u8[4096]{0}', space=vmem, size = 0x1000, scoped, tag = 'input window, operand 0, single buffered']
    #allocation3 [shape = 's32[1]{0}', space=sflag, size = 0x4, scoped, tag = 'scoped memory for tpu_custom_call.1']
    #allocation4 [shape = 's32[1]{0}', space=sflag, size = 0x4, scoped, tag = 'scoped memory for tpu_custom_call.1']
    #allocation5 [shape = 'u8[65536]{0}', space=vmem, size = 0x10000, scoped, tag = 'input window, operand 1, single buffered']
    #allocation6 [shape = 's32[1]{0}', space=sflag, size = 0x4, scoped, tag = 'scoped memory for tpu_custom_call.1']
    #allocation7 [shape = 'u8[65536]{0}', space=vmem, size = 0x10000, scoped, tag = 'input window, operand 3, single buffered']
    #allocation8 [shape = 'u8[512]{0}', space=vmem, size = 0x400, scoped, tag = 'input window, operand 4, single buffered']
    #allocation9 [shape = 's32[1]{0}', space=sflag, size = 0x4, scoped, tag = 'scoped memory for tpu_custom_call.1']
    #allocation10 [shape = 'u8[65536]{0}', space=vmem, size = 0x10000, scoped, tag = 'input window, operand 5, single buffered']
    #allocation11 [shape = 'u8[131072]{0}', space=vmem, size = 0x20000, scoped, tag = 'input window, operand 7, single buffered']
    #allocation12 [shape = 's32[1]{0}', space=sflag, size = 0x4, scoped, tag = 'scoped memory for tpu_custom_call.1']
    #allocation13 [shape = 'u8[4096]{0}', space=vmem, size = 0x1000, scoped, tag = 'output window, operand 0, single buffered']
    #allocation14 [shape = 'u8[4096]{0}', space=vmem, size = 0x1000, scoped, tag = 'output window, operand 1, single buffered']
    #allocation15 [shape = 's32[1]{0}', space=sflag, size = 0x4, scoped, tag = 'scoped memory for tpu_custom_call.1']
    %16 = vsyncpa [#allocation3], 0
    %17 = vsyncpa [#allocation6], 0
    %18 = vsyncpa [#allocation9], 0
    %19 = vsyncpa [#allocation12], 0
    %20 = vsyncpa [#allocation4], 0
    %21 = vsyncpa [#allocation15], 0
    // Predicated region
    $region2: #{tpu_custom_call.1} parent=1 // pred_check
      _
    $region3: #{tpu_custom_call.1} parent=1 // pred_check_branch
      %23 = sbr.rel (0) target = $region5
    $region4: #{tpu_custom_call.1} parent=1 // pred_region
      %25 = vsyncadd [#allocation3], 0
      %s27 = sshll.u32 %s0, 4
      %s28 = int_to_ptr.hbm [resolvable:$true] %s27
      %s29 = sshll.u32 [#allocation2], 4
      %s30 = int_to_ptr.vmem [resolvable:$true] %s29
      %32 = dma.hbm_to_vmem [thread:$0]  %s28, 128, %s30, [#allocation3]
    $region5: #{tpu_custom_call.1} parent=1 // pred_fallthru
      _
    // Predicated region
    $region6: #{tpu_custom_call.1} parent=1 // pred_check
      _
    $region7: #{tpu_custom_call.1} parent=1 // pred_check_branch
      %34 = sbr.rel (0) target = $region9
    $region8: #{tpu_custom_call.1} parent=1 // pred_region
      %36 = vsyncadd [#allocation6], 0
      %s37 = sshll.u32 %s1, 4
      %s38 = int_to_ptr.hbm [resolvable:$true] %s37
      %s39 = sshll.u32 [#allocation5], 4
      %s40 = int_to_ptr.vmem [resolvable:$true] %s39
      %45 = dma.hbm_to_vmem [thread:$0]  %s38, 2048, %s40, [#allocation6], 128, 128, 8
    $region9: #{tpu_custom_call.1} parent=1 // pred_fallthru
      _
    // Predicated region
    $region10: #{tpu_custom_call.1} parent=1 // pred_check
      _
    $region11: #{tpu_custom_call.1} parent=1 // pred_check_branch
      %47 = sbr.rel (0) target = $region13
    $region12: #{tpu_custom_call.1} parent=1 // pred_region
      _
    $region13: #{tpu_custom_call.1} parent=1 // pred_fallthru
      _
    // Predicated region
    $region14: #{tpu_custom_call.1} parent=1 // pred_check
      _
    $region15: #{tpu_custom_call.1} parent=1 // pred_check_branch
      %49 = sbr.rel (0) target = $region17
    $region16: #{tpu_custom_call.1} parent=1 // pred_region
      %51 = vsyncadd [#allocation6], 0
      %s52 = sshll.u32 %s3, 4
      %s53 = int_to_ptr.hbm [resolvable:$true] %s52
      %s54 = sshll.u32 [#allocation7], 4
      %s55 = int_to_ptr.vmem [resolvable:$true] %s54
      %60 = dma.hbm_to_vmem [thread:$0]  %s53, 2048, %s55, [#allocation6], 128, 128, 8
    $region17: #{tpu_custom_call.1} parent=1 // pred_fallthru
      _
    // Predicated region
    $region18: #{tpu_custom_call.1} parent=1 // pred_check
      _
    $region19: #{tpu_custom_call.1} parent=1 // pred_check_branch
      %62 = sbr.rel (0) target = $region21
    $region20: #{tpu_custom_call.1} parent=1 // pred_region
      %64 = vsyncadd [#allocation9], 0
      %s66 = sshll.u32 %s4, 4
      %s67 = int_to_ptr.hbm [resolvable:$true] %s66
      %s68 = sshll.u32 [#allocation8], 4
      %s69 = int_to_ptr.vmem [resolvable:$true] %s68
      %71 = dma.hbm_to_vmem [thread:$0]  %s67, 16, %s69, [#allocation9]
    $region21: #{tpu_custom_call.1} parent=1 // pred_fallthru
      _
    // Predicated region
    $region22: #{tpu_custom_call.1} parent=1 // pred_check
      _
    $region23: #{tpu_custom_call.1} parent=1 // pred_check_branch
      %73 = sbr.rel (0) target = $region25
    $region24: #{tpu_custom_call.1} parent=1 // pred_region
      %75 = vsyncadd [#allocation9], 0
      %s76 = sshll.u32 %s5, 4
      %s77 = int_to_ptr.hbm [resolvable:$true] %s76
      %s78 = sshll.u32 [#allocation10], 4
      %s79 = int_to_ptr.vmem [resolvable:$true] %s78
      %84 = dma.hbm_to_vmem [thread:$0]  %s77, 2048, %s79, [#allocation9], 128, 128, 8
    $region25: #{tpu_custom_call.1} parent=1 // pred_fallthru
      _
    // Predicated region
    $region26: #{tpu_custom_call.1} parent=1 // pred_check
      _
    $region27: #{tpu_custom_call.1} parent=1 // pred_check_branch
      %86 = sbr.rel (0) target = $region29
    $region28: #{tpu_custom_call.1} parent=1 // pred_region
      _
    $region29: #{tpu_custom_call.1} parent=1 // pred_fallthru
      _
    // Predicated region
    $region30: #{tpu_custom_call.1} parent=1 // pred_check
      _
    $region31: #{tpu_custom_call.1} parent=1 // pred_check_branch
      %88 = sbr.rel (0) target = $region33
    $region32: #{tpu_custom_call.1} parent=1 // pred_region
      %90 = vsyncadd [#allocation12], 0
      %s91 = sshll.u32 %s7, 4
      %s92 = int_to_ptr.hbm [resolvable:$true] %s91
      %s93 = sshll.u32 [#allocation11], 4
      %s94 = int_to_ptr.vmem [resolvable:$true] %s93
      %99 = dma.hbm_to_vmem [thread:$0]  %s92, 4096, %s94, [#allocation12], 256, 256, 16
    $region33: #{tpu_custom_call.1} parent=1 // pred_fallthru
      _
    // Predicated region
    $region34: #{tpu_custom_call.1} parent=1 // pred_check
      _
    $region35: #{tpu_custom_call.1} parent=1 // pred_check_branch
      %101 = sbr.rel (0) target = $region37
    $region36: #{tpu_custom_call.1} parent=1 // pred_region
      _
    $region37: #{tpu_custom_call.1} parent=1 // pred_fallthru
      _
    // Predicated region
    $region38: #{tpu_custom_call.1} parent=1 // pred_check
      _
    $region39: #{tpu_custom_call.1} parent=1 // pred_check_branch
      %103 = sbr.rel (0) target = $region41
    $region40: #{tpu_custom_call.1} parent=1 // pred_region
      %105 = dma.done [#allocation3], 128
    $region41: #{tpu_custom_call.1} parent=1 // pred_fallthru
      _
    // Predicated region
    $region42: #{tpu_custom_call.1} parent=1 // pred_check
      _
    $region43: #{tpu_custom_call.1} parent=1 // pred_check_branch
      %107 = sbr.rel (0) target = $region45
    $region44: #{tpu_custom_call.1} parent=1 // pred_region
      %109 = dma.done [#allocation6], 2048
    $region45: #{tpu_custom_call.1} parent=1 // pred_fallthru
      _
    // Predicated region
    $region46: #{tpu_custom_call.1} parent=1 // pred_check
      _
    $region47: #{tpu_custom_call.1} parent=1 // pred_check_branch
      %111 = sbr.rel (0) target = $region49
    $region48: #{tpu_custom_call.1} parent=1 // pred_region
      %113 = dma.done [#allocation6], 2048
    $region49: #{tpu_custom_call.1} parent=1 // pred_fallthru
      _
    // Predicated region
    $region50: #{tpu_custom_call.1} parent=1 // pred_check
      _
    $region51: #{tpu_custom_call.1} parent=1 // pred_check_branch
      %115 = sbr.rel (0) target = $region53
    $region52: #{tpu_custom_call.1} parent=1 // pred_region
      %117 = dma.done [#allocation9], 16
    $region53: #{tpu_custom_call.1} parent=1 // pred_fallthru
      _
    // Predicated region
    $region54: #{tpu_custom_call.1} parent=1 // pred_check
      _
    $region55: #{tpu_custom_call.1} parent=1 // pred_check_branch
      %119 = sbr.rel (0) target = $region57
    $region56: #{tpu_custom_call.1} parent=1 // pred_region
      %121 = dma.done [#allocation9], 2048
    $region57: #{tpu_custom_call.1} parent=1 // pred_fallthru
      _
    // Predicated region
    $region58: #{tpu_custom_call.1} parent=1 // pred_check
      _
    $region59: #{tpu_custom_call.1} parent=1 // pred_check_branch
      %123 = sbr.rel (0) target = $region61
    $region60: #{tpu_custom_call.1} parent=1 // pred_region
      %125 = dma.done [#allocation12], 4096
    $region61: #{tpu_custom_call.1} parent=1 // pred_fallthru
      _
    %v126 = vld [vmem:[#allocation2] sm:$0xff]
    %v127 = vld [vmem:[#allocation5] sm:$0xff]
    %v128 = vld [vmem:[#allocation5 + $0x8] sm:$0xff]
    %v129 = vld [vmem:[#allocation5 + $0x10] sm:$0xff]
    %v130 = vld [vmem:[#allocation5 + $0x18] sm:$0xff]
    %v131 = vld [vmem:[#allocation5 + $0x20] sm:$0xff]
    %v132 = vld [vmem:[#allocation5 + $0x28] sm:$0xff]
    %v133 = vld [vmem:[#allocation5 + $0x30] sm:$0xff]
    %v134 = vld [vmem:[#allocation5 + $0x38] sm:$0xff]
    %v135 = vld [vmem:[#allocation5 + $0x40] sm:$0xff]
    %v136 = vld [vmem:[#allocation5 + $0x48] sm:$0xff]
    %v137 = vld [vmem:[#allocation5 + $0x50] sm:$0xff]
    %v138 = vld [vmem:[#allocation5 + $0x58] sm:$0xff]
    %v139 = vld [vmem:[#allocation5 + $0x60] sm:$0xff]
    %v140 = vld [vmem:[#allocation5 + $0x68] sm:$0xff]
    %v141 = vld [vmem:[#allocation5 + $0x70] sm:$0xff]
    %v142 = vld [vmem:[#allocation5 + $0x78] sm:$0xff]
    %v143 = vld [vmem:[%s2] sm:$0x1]
    %v145 = vperm.slane %v143, 0
    %147 = vmatpush.msra.mxu0 %v142
    %148 = vmatpush.msra.mxu0 %v141
    %149 = vmatpush.msra.mxu0 %v140
    %150 = vmatpush.msra.mxu0 %v139
    %151 = vmatpush.msra.mxu0 %v138
    %152 = vmatpush.msra.mxu0 %v137
    %153 = vmatpush.msra.mxu0 %v136
    %154 = vmatpush.msra.mxu0 %v135
    %155 = vmatpush.msra.mxu0 %v134
    %156 = vmatpush.msra.mxu0 %v133
    %157 = vmatpush.msra.mxu0 %v132
    %158 = vmatpush.msra.mxu0 %v131
    %159 = vmatpush.msra.mxu0 %v130
    %160 = vmatpush.msra.mxu0 %v129
    %161 = vmatpush.msra.mxu0 %v128
    %162 = vmatpush.msra.mxu0 %v127
    %163 = vmatmul.f32.gmra.mxu0 %v126
    %v164 = vpop.f32.mrf.mxu0
    %v165 = vadd.f32 %v145, %v164
    %166 = vdwg.mxu0
    %v167 = vtanh.pop %v165
    %v168 = vld [vmem:[#allocation7] sm:$0xff]
    %v169 = vld [vmem:[#allocation7 + $0x8] sm:$0xff]
    %v170 = vld [vmem:[#allocation7 + $0x10] sm:$0xff]
    %v171 = vld [vmem:[#allocation7 + $0x18] sm:$0xff]
    %v172 = vld [vmem:[#allocation7 + $0x20] sm:$0xff]
    %v173 = vld [vmem:[#allocation7 + $0x28] sm:$0xff]
    %v174 = vld [vmem:[#allocation7 + $0x30] sm:$0xff]
    %v175 = vld [vmem:[#allocation7 + $0x38] sm:$0xff]
    %v176 = vld [vmem:[#allocation7 + $0x40] sm:$0xff]
    %v177 = vld [vmem:[#allocation7 + $0x48] sm:$0xff]
    %v178 = vld [vmem:[#allocation7 + $0x50] sm:$0xff]
    %v179 = vld [vmem:[#allocation7 + $0x58] sm:$0xff]
    %v180 = vld [vmem:[#allocation7 + $0x60] sm:$0xff]
    %v181 = vld [vmem:[#allocation7 + $0x68] sm:$0xff]
    %v182 = vld [vmem:[#allocation7 + $0x70] sm:$0xff]
    %v183 = vld [vmem:[#allocation7 + $0x78] sm:$0xff]
    %v184 = vld [vmem:[#allocation8] sm:$0x1]
    %v186 = vperm.slane %v184, 0
    %188 = vmatpush.msra.mxu0 %v183
    %189 = vmatpush.msra.mxu0 %v182
    %190 = vmatpush.msra.mxu0 %v181
    %191 = vmatpush.msra.mxu0 %v180
    %192 = vmatpush.msra.mxu0 %v179
    %193 = vmatpush.msra.mxu0 %v178
    %194 = vmatpush.msra.mxu0 %v177
    %195 = vmatpush.msra.mxu0 %v176
    %196 = vmatpush.msra.mxu0 %v175
    %197 = vmatpush.msra.mxu0 %v174
    %198 = vmatpush.msra.mxu0 %v173
    %199 = vmatpush.msra.mxu0 %v172
    %200 = vmatpush.msra.mxu0 %v171
    %201 = vmatpush.msra.mxu0 %v170
    %202 = vmatpush.msra.mxu0 %v169
    %203 = vmatpush.msra.mxu0 %v168
    %204 = vmatmul.f32.gmra.mxu0 %v167
    %v205 = vpop.f32.mrf.mxu0
    %v206 = vadd.f32 %v186, %v205
    %207 = vdwg.mxu0
    %v208 = vtanh.pop %v206
    %v209 = vld [vmem:[#allocation10] sm:$0xff]
    %v210 = vld [vmem:[#allocation10 + $0x8] sm:$0xff]
    %v211 = vld [vmem:[#allocation10 + $0x10] sm:$0xff]
    %v212 = vld [vmem:[#allocation10 + $0x18] sm:$0xff]
    %v213 = vld [vmem:[#allocation10 + $0x20] sm:$0xff]
    %v214 = vld [vmem:[#allocation10 + $0x28] sm:$0xff]
    %v215 = vld [vmem:[#allocation10 + $0x30] sm:$0xff]
    %v216 = vld [vmem:[#allocation10 + $0x38] sm:$0xff]
    %v217 = vld [vmem:[#allocation10 + $0x40] sm:$0xff]
    %v218 = vld [vmem:[#allocation10 + $0x48] sm:$0xff]
    %v219 = vld [vmem:[#allocation10 + $0x50] sm:$0xff]
    %v220 = vld [vmem:[#allocation10 + $0x58] sm:$0xff]
    %v221 = vld [vmem:[#allocation10 + $0x60] sm:$0xff]
    %v222 = vld [vmem:[#allocation10 + $0x68] sm:$0xff]
    %v223 = vld [vmem:[#allocation10 + $0x70] sm:$0xff]
    %v224 = vld [vmem:[#allocation10 + $0x78] sm:$0xff]
    %v225 = vld [vmem:[%s6] sm:$0x1]
    %v227 = vperm.slane %v225, 0
    %229 = vmatpush.msra.mxu0 %v224
    %230 = vmatpush.msra.mxu0 %v223
    %231 = vmatpush.msra.mxu0 %v222
    %232 = vmatpush.msra.mxu0 %v221
    %233 = vmatpush.msra.mxu0 %v220
    %234 = vmatpush.msra.mxu0 %v219
    %235 = vmatpush.msra.mxu0 %v218
    %236 = vmatpush.msra.mxu0 %v217
    %237 = vmatpush.msra.mxu0 %v216
    %238 = vmatpush.msra.mxu0 %v215
    %239 = vmatpush.msra.mxu0 %v214
    %240 = vmatpush.msra.mxu0 %v213
    %241 = vmatpush.msra.mxu0 %v212
    %242 = vmatpush.msra.mxu0 %v211
    %243 = vmatpush.msra.mxu0 %v210
    %244 = vmatpush.msra.mxu0 %v209
    %245 = vmatmul.f32.gmra.mxu0 %v208
    %v246 = vpop.f32.mrf.mxu0
    %v247 = vadd.f32 %v227, %v246
    %248 = vdwg.mxu0
    %v249 = vtanh.pop %v247
    %v250 = vld [vmem:[#allocation11] sm:$0xff]
    %v251 = vld [vmem:[#allocation11 + $0x8] sm:$0xff]
    %v252 = vld [vmem:[#allocation11 + $0x10] sm:$0xff]
    %v253 = vld [vmem:[#allocation11 + $0x18] sm:$0xff]
    %v254 = vld [vmem:[#allocation11 + $0x20] sm:$0xff]
    %v255 = vld [vmem:[#allocation11 + $0x28] sm:$0xff]
    %v256 = vld [vmem:[#allocation11 + $0x30] sm:$0xff]
    %v257 = vld [vmem:[#allocation11 + $0x38] sm:$0xff]
    %v258 = vld [vmem:[#allocation11 + $0x40] sm:$0xff]
    %v259 = vld [vmem:[#allocation11 + $0x48] sm:$0xff]
    %v260 = vld [vmem:[#allocation11 + $0x50] sm:$0xff]
    %v261 = vld [vmem:[#allocation11 + $0x58] sm:$0xff]
    %v262 = vld [vmem:[#allocation11 + $0x60] sm:$0xff]
    %v263 = vld [vmem:[#allocation11 + $0x68] sm:$0xff]
    %v264 = vld [vmem:[#allocation11 + $0x70] sm:$0xff]
    %v265 = vld [vmem:[#allocation11 + $0x78] sm:$0xff]
    %v266 = vld [vmem:[#allocation11 + $0x80] sm:$0xff]
    %v267 = vld [vmem:[#allocation11 + $0x88] sm:$0xff]
    %v268 = vld [vmem:[#allocation11 + $0x90] sm:$0xff]
    %v269 = vld [vmem:[#allocation11 + $0x98] sm:$0xff]
    %v270 = vld [vmem:[#allocation11 + $0xa0] sm:$0xff]
    %v271 = vld [vmem:[#allocation11 + $0xa8] sm:$0xff]
    %v272 = vld [vmem:[#allocation11 + $0xb0] sm:$0xff]
    %v273 = vld [vmem:[#allocation11 + $0xb8] sm:$0xff]
    %v274 = vld [vmem:[#allocation11 + $0xc0] sm:$0xff]
    %v275 = vld [vmem:[#allocation11 + $0xc8] sm:$0xff]
    %v276 = vld [vmem:[#allocation11 + $0xd0] sm:$0xff]
    %v277 = vld [vmem:[#allocation11 + $0xd8] sm:$0xff]
    %v278 = vld [vmem:[#allocation11 + $0xe0] sm:$0xff]
    %v279 = vld [vmem:[#allocation11 + $0xe8] sm:$0xff]
    %v280 = vld [vmem:[#allocation11 + $0xf0] sm:$0xff]
    %v281 = vld [vmem:[#allocation11 + $0xf8] sm:$0xff]
    %v282 = vld [vmem:[%s8] sm:$0x3]
    %v284 = vperm.slane %v282, 0
    %v285 = vperm.slane %v282, 1
    %288 = vmatpush.msra.mxu0 %v280
    %289 = vmatpush.msra.mxu0 %v278
    %290 = vmatpush.msra.mxu0 %v276
    %291 = vmatpush.msra.mxu0 %v274
    %292 = vmatpush.msra.mxu0 %v272
    %293 = vmatpush.msra.mxu0 %v270
    %294 = vmatpush.msra.mxu0 %v268
    %295 = vmatpush.msra.mxu0 %v266
    %296 = vmatpush.msra.mxu0 %v264
    %297 = vmatpush.msra.mxu0 %v262
    %298 = vmatpush.msra.mxu0 %v260
    %299 = vmatpush.msra.mxu0 %v258
    %300 = vmatpush.msra.mxu0 %v256
    %301 = vmatpush.msra.mxu0 %v254
    %302 = vmatpush.msra.mxu0 %v252
    %303 = vmatpush.msra.mxu0 %v250
    %304 = vmatmul.f32.gmra.mxu0 %v249
    %v305 = vpop.f32.mrf.mxu0
    %v306 = vadd.f32 %v284, %v305
    %307 = vdwg.mxu0
    %308 = vmatpush.msra.mxu0 %v281
    %309 = vmatpush.msra.mxu0 %v279
    %310 = vmatpush.msra.mxu0 %v277
    %311 = vmatpush.msra.mxu0 %v275
    %312 = vmatpush.msra.mxu0 %v273
    %313 = vmatpush.msra.mxu0 %v271
    %314 = vmatpush.msra.mxu0 %v269
    %315 = vmatpush.msra.mxu0 %v267
    %316 = vmatpush.msra.mxu0 %v265
    %317 = vmatpush.msra.mxu0 %v263
    %318 = vmatpush.msra.mxu0 %v261
    %319 = vmatpush.msra.mxu0 %v259
    %320 = vmatpush.msra.mxu0 %v257
    %321 = vmatpush.msra.mxu0 %v255
    %322 = vmatpush.msra.mxu0 %v253
    %323 = vmatpush.msra.mxu0 %v251
    %324 = vmatmul.f32.gmra.mxu0 %v249
    %v325 = vpop.f32.mrf.mxu0
    %v326 = vadd.f32 %v285, %v325
    %327 = vdwg.mxu0
    %v328 = vtanh.pop %v306
    %v329 = vmul.f32 %v328, 10.0
    %330 = vst [vmem:[#allocation13] sm:$0xff] %v329
    %v331 = vxor.u32 %v326, 2147483648
    %v332 = vmul.f32 %v331, 1.442695
    %v333 = vpow.pop %v332
    %v334 = vadd.f32 %v333, 1.0
    %v335 = vrcp.pop %v334
    %v336 = vmul.f32 %v334, %v335
    %v337 = vsub.f32 1.0, %v336
    %v338 = vmul.f32 %v335, %v337
    %v339 = vadd.f32 %v335, %v338
    %vm340 = vweird.f32 %v334
    %vm341 = vweird.f32 %v335
    %vm342 = vmor %vm340, %vm341
    %v343 = vsel %vm342, %v335, %v339
    %v344 = vand.u32 2147483647, %v334
    %vm345 = vcmp.eq.f32.partialorder %v344, 8.507059e+37
    %v346 = vand.u32 %v334, 2147483648
    %v347 = vor.u32 1.1754944e-38, %v346
    %v348 = vsel %vm345, %v347, %v343
    %v349 = vmul.f32 1.0, %v348
    %v350 = vadd.f32 %v349, 1e-06
    %351 = vst [vmem:[#allocation14] sm:$0xff] %v350
    // Predicated region
    $region62: #{tpu_custom_call.1} parent=1 // pred_check
      _
    $region63: #{tpu_custom_call.1} parent=1 // pred_check_branch
      %353 = sbr.rel (0) target = $region65
    $region64: #{tpu_custom_call.1} parent=1 // pred_region
      %355 = vsyncadd [#allocation4], 0
      %s357 = sshll.u32 [#allocation13], 4
      %s358 = int_to_ptr.vmem [resolvable:$true] %s357
      %s359 = sshll.u32 %s9, 4
      %s360 = int_to_ptr.hbm [resolvable:$true] %s359
      %362 = dma.vmem_to_hbm [thread:$0]  %s358, 128, %s360, [#allocation4]
    $region65: #{tpu_custom_call.1} parent=1 // pred_fallthru
      _
    // Predicated region
    $region66: #{tpu_custom_call.1} parent=1 // pred_check
      _
    $region67: #{tpu_custom_call.1} parent=1 // pred_check_branch
      %364 = sbr.rel (0) target = $region69
    $region68: #{tpu_custom_call.1} parent=1 // pred_region
      %366 = vsyncadd [#allocation15], 0
      %s368 = sshll.u32 [#allocation14], 4
      %s369 = int_to_ptr.vmem [resolvable:$true] %s368
      %s370 = sshll.u32 %s10, 4
      %s371 = int_to_ptr.hbm [resolvable:$true] %s370
      %373 = dma.vmem_to_hbm [thread:$0]  %s369, 128, %s371, [#allocation15]
    $region69: #{tpu_custom_call.1} parent=1 // pred_fallthru
      _
    // Predicated region
    $region70: #{tpu_custom_call.1} parent=1 // pred_check
      _
    $region71: #{tpu_custom_call.1} parent=1 // pred_check_branch
      %375 = sbr.rel (0) target = $region73
    $region72: #{tpu_custom_call.1} parent=1 // pred_region
      %377 = dma.done [#allocation4], 128
    $region73: #{tpu_custom_call.1} parent=1 // pred_fallthru
      _
    // Predicated region
    $region74: #{tpu_custom_call.1} parent=1 // pred_check
      _
    $region75: #{tpu_custom_call.1} parent=1 // pred_check_branch
      %379 = sbr.rel (0) target = $region77
    $region76: #{tpu_custom_call.1} parent=1 // pred_region
      %381 = dma.done [#allocation15], 128
    $region77: #{tpu_custom_call.1} parent=1 // pred_fallthru
      _
    %382 = vsyncpa [#allocation3], 1
    %383 = vsyncpa [#allocation6], 1
    %384 = vsyncpa [#allocation9], 1
    %385 = vsyncpa [#allocation12], 1
    %386 = vsyncpa [#allocation4], 1
    %387 = vsyncpa [#allocation15], 1

</llo_original>
